<compile_context>
chip_gen: v6e
topology: v6e:2x2x1
jax: 0.10.0
libtpu: 0.0.40
codegen_flags: <defaults>
</compile_context>

<pallas_src>
import math
from functools import partial

import jax
import jax.numpy as jnp
from jax.experimental import pallas as pl
from jax.experimental.pallas import tpu as pltpu

EPS = 1e-5
_LANE = 128
_VMEM_LIMIT = 48 * 1024 * 1024   # leaves headroom under v7x's 64 MiB physical VMEM


def _round_up(n, m):
    return ((n + m - 1) // m) * m


# -----------------------------------------------------------------------------
# Kernel 1: im2col'd conv tile (single matmul) + bias (+ optional fused ReLU)
#           + optional per-sample sum/sumsq accumulation for IBNorm.
# -----------------------------------------------------------------------------
def _conv_bias_kernel(p_ref, w_ref, bias_ref, y_ref, *stats_refs,
                      tm, hw, with_stats, apply_relu):
    t = pl.program_id(1)

    # One MXU matmul per tile: K = kh*kw*Cin folded into the contraction dim.
    y = jnp.dot(p_ref[...], w_ref[...], preferred_element_type=jnp.float32)
    y = y + bias_ref[...]                                  # (tm, Cp) + (1, Cp)

    if with_stats:
        s_ref = stats_refs[0]                              # (1, 2, Cp) revisited
        # Mask rows that are only M-padding (their conv output is just bias).
        row = jax.lax.broadcasted_iota(jnp.int32, (tm, 1), 0) + t * tm
        valid = (row < hw).astype(jnp.float32)
        ym = y * valid
        s = jnp.sum(ym, axis=0, keepdims=True)             # (1, Cp)
        ss = jnp.sum(ym * y, axis=0, keepdims=True)        # (1, Cp)  masked y^2

        @pl.when(t == 0)
        def _init():
            s_ref[...] = jnp.zeros_like(s_ref)

        s_ref[...] += jnp.concatenate([s, ss], axis=0)[None]

    if apply_relu:
        y = jnp.maximum(y, 0.0)
    y_ref[...] = y.astype(y_ref.dtype)


# -----------------------------------------------------------------------------
# Kernel 2: single fused normalization pass  out = relu(y * a + d)
#           (a, d already encode the BN-vs-IN selection per (sample, channel)).
# -----------------------------------------------------------------------------
def _norm_relu_kernel(y_ref, a_ref, d_ref, o_ref, *, apply_relu):
    o = y_ref[...].astype(jnp.float32) * a_ref[0] + d_ref[0]
    if apply_relu:
        o = jnp.maximum(o, 0.0)
    o_ref[...] = o.astype(o_ref.dtype)


# -----------------------------------------------------------------------------
# Wrapper: layout plumbing (NCHW<->patches), stats->scale/shift, pallas_calls
# -----------------------------------------------------------------------------
def conv2d_ibnorm_relu(x_nchw, weight, bias, gamma, beta, *,
                       stride=1, padding=0, dilation=1, groups=1,
                       with_ibn=True, with_relu=True, tile_m=512):
    """Conv2dIBNormRelu forward (train-mode norm semantics).

    x_nchw : [B, Cin, H, W]       weight : [Cout, Cin, kh, kw]
    bias   : [Cout]               gamma, beta : [Cout // 2]
    """
    # TODO(synk): groups != 1 is not supported by the folded-tap matmul kernel.
    assert groups == 1, "groups != 1 not supported"

    B, Cin, H, W = x_nchw.shape
    Cout, _, kh, kw = weight.shape
    bn_c = Cout // 2
    Ho = (H + 2 * padding - dilation * (kh - 1) - 1) // stride + 1
    Wo = (W + 2 * padding - dilation * (kw - 1) - 1) // stride + 1
    hw = Ho * Wo
    K = kh * kw * Cin
    cout_p = _round_up(Cout, _LANE)

    tm = min(tile_m, _round_up(hw, 8))
    n_t = pl.cdiv(hw, tm)
    m_pad = n_t * tm

    # ---- im2col patch extraction: pure layout plumbing, no FLOPs ------------
    x = jnp.transpose(x_nchw, (0, 2, 3, 1)).astype(jnp.float32)
    x = jnp.pad(x, ((0, 0), (padding, padding), (padding, padding), (0, 0)))
    taps = []
    for dy in range(kh):
        for dx in range(kw):
            y0, x0 = dy * dilation, dx * dilation
            taps.append(x[:, y0:y0 + (Ho - 1) * stride + 1:stride,
                            x0:x0 + (Wo - 1) * stride + 1:stride, :])
    patches = jnp.concatenate(taps, axis=-1)                # (B, Ho, Wo, K)
    patches = patches.reshape(B, hw, K)
    patches = jnp.pad(patches, ((0, 0), (0, m_pad - hw), (0, 0)))
    patches = patches.reshape(B * m_pad, K).astype(jnp.bfloat16)

    # Weight -> (K, Cout_pad) with matching (dy, dx, cin) tap ordering.
    w_fold = jnp.transpose(weight, (2, 3, 1, 0)).reshape(K, Cout)
    w_fold = jnp.pad(w_fold.astype(jnp.float32),
                     ((0, 0), (0, cout_p - Cout))).astype(jnp.bfloat16)
    bias_p = jnp.pad(bias.astype(jnp.float32),
                     (0, cout_p - Cout)).reshape(1, cout_p)

    grid = (B, n_t)
    row_map = lambda bb, tt: (bb * n_t + tt, 0)

    conv_flops = 2 * B * m_pad * K * cout_p
    conv_bytes = (patches.size * 2 + w_fold.size * 2 + bias_p.size * 4
                  + B * m_pad * cout_p * 2
                  + (B * 2 * cout_p * 4 if with_ibn else 0))

    in_specs = [
        pl.BlockSpec((tm, K), row_map),                     # patch tile
        pl.BlockSpec((K, cout_p), lambda bb, tt: (0, 0)),   # folded weight (resident)
        pl.BlockSpec((1, cout_p), lambda bb, tt: (0, 0)),   # bias (resident)
    ]
    y_spec = pl.BlockSpec((tm, cout_p), row_map)
    y_shape = jax.ShapeDtypeStruct((B * m_pad, cout_p), jnp.bfloat16)

    if with_ibn:
        out_shape = (y_shape, jax.ShapeDtypeStruct((B, 2, cout_p), jnp.float32))
        out_specs = (y_spec,
                     pl.BlockSpec((1, 2, cout_p), lambda bb, tt: (bb, 0, 0)))
        semantics = ("parallel", "arbitrary")   # stats accumulate along t
    else:
        out_shape = y_shape
        out_specs = y_spec
        semantics = ("parallel", "parallel")

    res = pl.pallas_call(
        partial(_conv_bias_kernel, tm=tm, hw=hw, with_stats=with_ibn,
                apply_relu=(with_relu and not with_ibn)),
        grid=grid,
        in_specs=in_specs,
        out_specs=out_specs,
        out_shape=out_shape,
        compiler_params=pltpu.CompilerParams(
            dimension_semantics=semantics,
            vmem_limit_bytes=_VMEM_LIMIT),
        cost_estimate=pl.CostEstimate(flops=conv_flops, transcendentals=0,
                                      bytes_accessed=conv_bytes),
    )(patches, w_fold, bias_p)

    if with_ibn:
        y_flat, stats = res
        # Tiny (B, Cout_pad) stats -> per-(sample, channel) scale/shift.
        n = float(hw)
        sum_bc = stats[:, 0, :]
        ssq_bc = stats[:, 1, :]
        mu_in = sum_bc / n
        var_in = jnp.maximum(ssq_bc / n - mu_in * mu_in, 0.0)
        mu_bn = jnp.sum(sum_bc, axis=0) / (B * n)
        var_bn = jnp.maximum(jnp.sum(ssq_bc, axis=0) / (B * n) - mu_bn * mu_bn, 0.0)

        is_bn = jnp.arange(cout_p) < bn_c
        g_full = jnp.where(is_bn,
                           jnp.pad(gamma.astype(jnp.float32), (0, cout_p - bn_c)),
                           1.0)
        s_full = jnp.where(is_bn,
                           jnp.pad(beta.astype(jnp.float32), (0, cout_p - bn_c)),
                           0.0)
        mu_sel = jnp.where(is_bn[None, :], mu_bn[None, :], mu_in)     # (B, Cp)
        var_sel = jnp.where(is_bn[None, :], var_bn[None, :], var_in)  # (B, Cp)
        a = jax.lax.rsqrt(var_sel + EPS) * g_full[None, :]
        d = s_full[None, :] - mu_sel * a
        a = a.reshape(B, 1, cout_p)
        d = d.reshape(B, 1, cout_p)

        out = pl.pallas_call(
            partial(_norm_relu_kernel, apply_relu=with_relu),
            grid=grid,
            in_specs=[
                pl.BlockSpec((tm, cout_p), row_map),
                pl.BlockSpec((1, 1, cout_p), lambda bb, tt: (bb, 0, 0)),
                pl.BlockSpec((1, 1, cout_p), lambda bb, tt: (bb, 0, 0)),
            ],
            out_specs=pl.BlockSpec((tm, cout_p), row_map),
            out_shape=jax.ShapeDtypeStruct((B * m_pad, cout_p), jnp.bfloat16),
            compiler_params=pltpu.CompilerParams(
                dimension_semantics=("parallel", "parallel"),
                vmem_limit_bytes=_VMEM_LIMIT),
            cost_estimate=pl.CostEstimate(
                flops=2 * B * m_pad * cout_p, transcendentals=0,
                bytes_accessed=4 * B * m_pad * cout_p + 8 * B * cout_p),
        )(y_flat, a, d)
    else:
        out = res

    out = out.reshape(B, m_pad, cout_p)[:, :hw, :Cout].reshape(B, Ho, Wo, Cout)
    return jnp.transpose(out, (0, 3, 1, 2)).astype(x_nchw.dtype)


# -----------------------------------------------------------------------------
# Pure-JAX reference (f32) for a correctness check
# -----------------------------------------------------------------------------
def _reference(x, weight, bias, gamma, beta, *, padding,
               with_ibn=True, with_relu=True):
    y = jax.lax.conv_general_dilated(
        x, weight, window_strides=(1, 1),
        padding=[(padding, padding), (padding, padding)],
        dimension_numbers=("NCHW", "OIHW", "NCHW")) + bias[None, :, None, None]
    if with_ibn:
        bn_c = weight.shape[0] // 2
        yb, yi = y[:, :bn_c], y[:, bn_c:]
        mu = yb.mean(axis=(0, 2, 3), keepdims=True)
        var = jnp.square(yb - mu).mean(axis=(0, 2, 3), keepdims=True)
        yb = (yb - mu) * jax.lax.rsqrt(var + EPS) * gamma[None, :, None, None] \
             + beta[None, :, None, None]
        mu = yi.mean(axis=(2, 3), keepdims=True)
        var = jnp.square(yi - mu).mean(axis=(2, 3), keepdims=True)
        yi = (yi - mu) * jax.lax.rsqrt(var + EPS)
        y = jnp.concatenate([yb, yi], axis=1)
    if with_relu:
        y = jnp.maximum(y, 0.0)
    return y


if __name__ == "__main__":
    key = jax.random.PRNGKey(0)
    k1, k2, k3, k4, k5 = jax.random.split(key, 5)

    B, Cin, H, W = 2, 4, 16, 16
    Cout, K, P = 8, 3, 1

    x = jax.random.normal(k1, (B, Cin, H, W), jnp.float32)
    w = jax.random.normal(k2, (Cout, Cin, K, K), jnp.float32) / math.sqrt(K * K * Cin)
    b = jax.random.normal(k3, (Cout,), jnp.float32) * 0.1
    gamma = 1.0 + 0.1 * jax.random.normal(k4, (Cout // 2,), jnp.float32)
    beta = 0.1 * jax.random.normal(k5, (Cout // 2,), jnp.float32)

    # Full Conv2dIBNormRelu (default: with_ibn=True, with_relu=True)
    out = conv2d_ibnorm_relu(x, w, b, gamma, beta, stride=1, padding=P)
    out = jax.block_until_ready(out)
    assert out.shape == (B, Cout, H, W)
    assert bool(jnp.all(jnp.isfinite(out)))
    ref = _reference(x, w, b, gamma, beta, padding=P)
    assert bool(jnp.allclose(out, ref, atol=1e-1, rtol=1e-1)), \
        float(jnp.max(jnp.abs(out - ref)))

    # Plain conv variant (with_ibn=False, with_relu=False): fully parallel grid.
    out2 = conv2d_ibnorm_relu(x, w, b, gamma, beta, stride=1, padding=P,
                              with_ibn=False, with_relu=False)
    out2 = jax.block_until_ready(out2)
    ref2 = _reference(x, w, b, gamma, beta, padding=P,
                      with_ibn=False, with_relu=False)
    assert bool(jnp.allclose(out2, ref2, atol=1e-1, rtol=1e-1)), \
        float(jnp.max(jnp.abs(out2 - ref2)))

    print("KERNEL_OK")
</pallas_src>

<mosaic_0001>
module attributes {stable_mosaic.version = 11 : i64} {
  func.func @_conv_bias_kernel(%arg0: i32, %arg1: i32, %arg2: memref<256x36xbf16, #tpu.memory_space<vmem>>, %arg3: memref<36x128xbf16, #tpu.memory_space<vmem>>, %arg4: memref<1x128xf32, #tpu.memory_space<vmem>>, %arg5: memref<256x128xbf16, #tpu.memory_space<vmem>>, %arg6: memref<1x2x128xf32, #tpu.memory_space<vmem>>) attributes {dimension_semantics = [#tpu.dimension_semantics<parallel>, #tpu.dimension_semantics<arbitrary>], iteration_bounds = array<i64: 2, 1>, scalar_prefetch = 0 : i64, scratch_operands = 0 : i64, tpu.core_type = #tpu.core_type<tc>, window_params = [{transform_indices = @transform_0, window_bounds = array<i64: 256, 36>}, {pipeline_mode = #tpu.pipeline_mode<synchronous>, transform_indices = @transform_1, window_bounds = array<i64: 36, 128>}, {pipeline_mode = #tpu.pipeline_mode<synchronous>, transform_indices = @transform_2, window_bounds = array<i64: 1, 128>}, {transform_indices = @transform_3, window_bounds = array<i64: 256, 128>}, {transform_indices = @transform_4, window_bounds = array<i64: 1, 2, 128>}]} {
    %c0 = arith.constant 0 : index
    %c0_0 = arith.constant 0 : index
    %0 = vector.load %arg2[%c0, %c0_0] : memref<256x36xbf16, #tpu.memory_space<vmem>>, vector<256x36xbf16>
    %c0_1 = arith.constant 0 : index
    %c0_2 = arith.constant 0 : index
    %1 = vector.load %arg3[%c0_1, %c0_2] : memref<36x128xbf16, #tpu.memory_space<vmem>>, vector<36x128xbf16>
    %cst = arith.constant dense<0.000000e+00> : vector<256x128xf32>
    %2 = tpu.matmul %0, %1, %cst {dimension_numbers = #tpu.dot_dimension_numbers<[1], [0], [0], [1], [0, 0, 1, 1], [], []>} : vector<256x36xbf16>, vector<36x128xbf16>, vector<256x128xf32> -> vector<256x128xf32>
    %c0_3 = arith.constant 0 : index
    %c0_4 = arith.constant 0 : index
    %3 = vector.load %arg4[%c0_3, %c0_4] : memref<1x128xf32, #tpu.memory_space<vmem>>, vector<1x128xf32>
    %4 = vector.broadcast %3 : vector<1x128xf32> to vector<256x128xf32>
    %5 = arith.addf %2, %4 : vector<256x128xf32>
    %6 = tpu.iota {dimensions = array<i32: 0>} : vector<256x1xi32>
    %c256_i32 = arith.constant 256 : i32
    %7 = arith.muli %arg1, %c256_i32 : i32
    %8 = vector.broadcast %7 : i32 to vector<256x1xi32>
    %9 = arith.addi %6, %8 : vector<256x1xi32>
    %c256_i32_5 = arith.constant 256 : i32
    %10 = vector.broadcast %c256_i32_5 : i32 to vector<256x1xi32>
    %11 = arith.cmpi slt, %9, %10 : vector<256x1xi32>
    %12 = arith.extui %11 : vector<256x1xi1> to vector<256x1xi32>
    %13 = arith.sitofp %12 : vector<256x1xi32> to vector<256x1xf32>
    %14 = vector.broadcast %13 : vector<256x1xf32> to vector<256x128xf32>
    %15 = arith.mulf %5, %14 : vector<256x128xf32>
    %cst_6 = arith.constant dense<0.000000e+00> : vector<128xf32>
    %16 = vector.multi_reduction <add>, %15, %cst_6 [0] : vector<256x128xf32> to vector<128xf32>
    %17 = vector.shape_cast %16 : vector<128xf32> to vector<1x128xf32>
    %18 = arith.mulf %15, %5 : vector<256x128xf32>
    %cst_7 = arith.constant dense<0.000000e+00> : vector<128xf32>
    %19 = vector.multi_reduction <add>, %18, %cst_7 [0] : vector<256x128xf32> to vector<128xf32>
    %20 = vector.shape_cast %19 : vector<128xf32> to vector<1x128xf32>
    %c0_i32 = arith.constant 0 : i32
    %21 = arith.cmpi eq, %arg1, %c0_i32 : i32
    %22 = arith.extui %21 : i1 to i32
    %c0_i32_8 = arith.constant 0 : i32
    %23 = arith.cmpi ne, %22, %c0_i32_8 : i32
    scf.if %23 {
      %cst_17 = arith.constant 0.000000e+00 : f32
      %31 = vector.broadcast %cst_17 : f32 to vector<1x2x128xf32>
      %c0_18 = arith.constant 0 : index
      %c0_19 = arith.constant 0 : index
      %c0_20 = arith.constant 0 : index
      %32 = vector.load %arg6[%c0_18, %c0_19, %c0_20] : memref<1x2x128xf32, #tpu.memory_space<vmem>>, vector<1x2x128xf32>
      tpu.vector_store %arg6[%c0_18, %c0_19, %c0_20], %31 {strides = array<i32>} : memref<1x2x128xf32, #tpu.memory_space<vmem>>, vector<1x2x128xf32>,
    } else {
    }
    %c0_9 = arith.constant 0 : index
    %c0_10 = arith.constant 0 : index
    %c0_11 = arith.constant 0 : index
    %24 = vector.load %arg6[%c0_9, %c0_10, %c0_11] : memref<1x2x128xf32, #tpu.memory_space<vmem>>, vector<1x2x128xf32>
    %25 = tpu.concatenate %17, %20 in 0 : vector<1x128xf32>, vector<1x128xf32> -> vector<2x128xf32>
    %26 = vector.shape_cast %25 : vector<2x128xf32> to vector<1x2x128xf32>
    %27 = arith.addf %24, %26 : vector<1x2x128xf32>
    %c0_12 = arith.constant 0 : index
    %c0_13 = arith.constant 0 : index
    %c0_14 = arith.constant 0 : index
    %28 = vector.load %arg6[%c0_12, %c0_13, %c0_14] : memref<1x2x128xf32, #tpu.memory_space<vmem>>, vector<1x2x128xf32>
    tpu.vector_store %arg6[%c0_12, %c0_13, %c0_14], %27 {strides = array<i32>} : memref<1x2x128xf32, #tpu.memory_space<vmem>>, vector<1x2x128xf32>,
    %29 = arith.truncf %5 : vector<256x128xf32> to vector<256x128xbf16>
    %c0_15 = arith.constant 0 : index
    %c0_16 = arith.constant 0 : index
    %30 = vector.load %arg5[%c0_15, %c0_16] : memref<256x128xbf16, #tpu.memory_space<vmem>>, vector<256x128xbf16>
    tpu.vector_store %arg5[%c0_15, %c0_16], %29 {strides = array<i32>} : memref<256x128xbf16, #tpu.memory_space<vmem>>, vector<256x128xbf16>,
    return
  }
  func.func @transform_0(%arg0: i32, %arg1: i32) -> (i32, i32) {
    %c1_i32 = arith.constant 1 : i32
    %0 = arith.muli %arg0, %c1_i32 : i32
    %1 = arith.addi %0, %arg1 : i32
    %c0_i32 = arith.constant 0 : i32
    %c0_i32_0 = arith.constant 0 : i32
    return %1, %c0_i32 : i32, i32
  }
  func.func @transform_1(%arg0: i32, %arg1: i32) -> (i32, i32) {
    %c0_i32 = arith.constant 0 : i32
    %c0_i32_0 = arith.constant 0 : i32
    %c0_i32_1 = arith.constant 0 : i32
    return %c0_i32, %c0_i32_0 : i32, i32
  }
  func.func @transform_2(%arg0: i32, %arg1: i32) -> (i32, i32) {
    %c0_i32 = arith.constant 0 : i32
    %c0_i32_0 = arith.constant 0 : i32
    %c0_i32_1 = arith.constant 0 : i32
    return %c0_i32, %c0_i32_0 : i32, i32
  }
  func.func @transform_3(%arg0: i32, %arg1: i32) -> (i32, i32) {
    %c1_i32 = arith.constant 1 : i32
    %0 = arith.muli %arg0, %c1_i32 : i32
    %1 = arith.addi %0, %arg1 : i32
    %c0_i32 = arith.constant 0 : i32
    %c0_i32_0 = arith.constant 0 : i32
    return %1, %c0_i32 : i32, i32
  }
  func.func @transform_4(%arg0: i32, %arg1: i32) -> (i32, i32, i32) {
    %c0_i32 = arith.constant 0 : i32
    %c0_i32_0 = arith.constant 0 : i32
    %c0_i32_1 = arith.constant 0 : i32
    return %arg0, %c0_i32, %c0_i32_0 : i32, i32, i32
  }
}

</mosaic_0001>

<llo_original>
// kernel: tpu_custom_call.1
$region0: #{tpu_custom_call.1}
  #allocation0 [shape = 'u32[]', space=smem, size = 0x4, offset = 0x4, fixed_abs, tag = 'smem constant byte address 0x4 - core index']
  #allocation1 [shape = 'u32[144,128]{1,0:T(1,128)}', space=vmem, size = 0x12000, scoped, tag = 'internal scratch']
  %s0 = inlined_call_operand.vmem [shape: bf16[512,36], index: 0, kind: input, shape index: {}]
  %s1 = inlined_call_operand.vmem [shape: bf16[36,128], index: 1, kind: input, shape index: {}]
  %s2 = inlined_call_operand.vmem [shape: f32[1,128], index: 2, kind: input, shape index: {}]
  %s3 = inlined_call_operand.hbm [shape: bf16[512,128], index: 3, kind: output, shape index: {0}]
  %s4 = inlined_call_operand.hbm [shape: f32[2,2,128], index: 4, kind: output, shape index: {1}]
  %5 = xla_tuple %s3, %s4
  %s6 = sld [smem:[#allocation0]]
  $region57: #{tpu_custom_call.1} parent=0
    _
  %s8 = ssub.s32 1, %s6
  %s9 = scalar_select 0, %s8, %s6
  $region1: #{tpu_custom_call.1} parent=0
    #allocation2 [shape = 'u8[131072]{0}', space=vmem, size = 0x20000, scoped, tag = 'output window, operand 0']
    #allocation3 [shape = 's32[2]{0}', space=sflag, size = 0x8, scoped, tag = 'scoped memory for tpu_custom_call.1']
    #allocation4 [shape = 'u8[2048]{0}', space=vmem, size = 0x800, scoped, tag = 'output window, operand 1']
    #allocation5 [shape = 's32[2]{0}', space=sflag, size = 0x8, scoped, tag = 'scoped memory for tpu_custom_call.1']
    %10 = vsyncpa [#allocation3], 0
    %s11 = scalar_lea.sflag [#allocation3], 1
    %12 = vsyncpa %s11, 0
    %13 = vsyncpa [#allocation5], 0
    %s14 = scalar_lea.sflag [#allocation5], 1
    %15 = vsyncpa %s14, 0
    loop: start=0, step=1, limit=4
    $region2: #{tpu_custom_call.1} parent=1 // loop_pre_header
      _
    $region3: #{tpu_custom_call.1} parent=1 // loop_header
      %s17 = sphi 0, %s21
      %p18 = scmp.ge.s32.totalorder %s17, 4
      %s24 = sphi 0, %s36
      %s25 = sphi 0, %s32
      %s26 = sphi 0, %s24
      %s27 = sphi 0, %s25
      %s28 = sphi 0, %s26
      %s29 = sphi 0, %s27
      %s41 = sphi 0, %s43
      %s44 = sphi 0, %s41
      %s45 = sphi 0, %s44
      %s61 = sphi 0, %s45
      %s65 = sphi 0, %s65
      %s67 = sphi 0, %s65
      %s68 = sphi 0, %s67
      %s82 = sphi 0, %s68
      %s86 = sphi 0, %s86
      %s88 = sphi 0, %s86
      %s89 = sphi 0, %s88
      %s103 = sphi 0, %s89
      %s111 = sphi 0, %s113
      %s114 = sphi 0, %s111
      %s115 = sphi 0, %s114
      %s131 = sphi 0, %s115
      %s137 = sphi 0, %s139
      %s140 = sphi 0, %s137
      %s141 = sphi 0, %s140
      %s157 = sphi 0, %s141
    $region4: #{tpu_custom_call.1} parent=1 // loop_header_branch
      %20 = sbr.rel (%p18) target = $region8
    $region5: #{tpu_custom_call.1} parent=1 // loop_body
      %s22 = ssub.s32 %s17, 1
      %s23 = ssub.s32 %s17, 2
      %s30 = sadd.s32 1, %s25
      %p31 = scmp.ge.s32.totalorder %s30, 1
      %s32 = scalar_select %p31, 0, %s30
      %s33 = sadd.s32 1, %s24
      %s34 = scalar_select %p31, %s33, %s24
      %p35 = scmp.ge.s32.totalorder %s34, 2
      %s36 = scalar_select %p35, 0, %s34
      %s37 = sadd.s32 %s24, %s25
      %s38 = sadd.s32 %s36, %s32
      %s39 = ssub.s32 %s37, %s38
      %p40 = scmp.eq.s32.totalorder %s39, 0
      %s42 = sadd.s32 %s41, 1
      %s43 = scalar_select %p40, %s41, %s42
      %p46 = pneg %p40
      %p47 = scmp.eq.s32.totalorder %s17, 1
      %p48 = por %p46, %p47
      %p49 = scmp.ne.s32.totalorder %s41, %s44
      %p50 = scmp.eq.s32.totalorder %s17, 0
      %p51 = por %p49, %p50
      %p52 = scmp.ne.s32.totalorder %s41, %s44
      %p53 = scmp.eq.s32.totalorder %s22, 1
      %p54 = por %p52, %p53
      %p55 = scmp.ne.s32.totalorder %s44, %s45
      %p56 = scmp.eq.s32.totalorder %s22, 0
      %p57 = por %p55, %p56
      %p58 = scmp.ne.s32.totalorder %s44, %s45
      %p59 = scmp.eq.s32.totalorder %s23, 1
      %p60 = por %p58, %p59
      %p62 = scmp.ne.s32.totalorder %s45, %s61
      %p63 = scmp.eq.s32.totalorder %s23, 0
      %p64 = por %p62, %p63
      %s66 = sadd.s32 %s65, 1
      %p69 = scmp.eq.s32.totalorder %s17, 1
      %p70 = scmp.ne.s32.totalorder %s65, %s67
      %p71 = scmp.eq.s32.totalorder %s17, 0
      %p72 = por %p70, %p71
      %p73 = scmp.ne.s32.totalorder %s65, %s67
      %p74 = scmp.eq.s32.totalorder %s22, 1
      %p75 = por %p73, %p74
      %p76 = scmp.ne.s32.totalorder %s67, %s68
      %p77 = scmp.eq.s32.totalorder %s22, 0
      %p78 = por %p76, %p77
      %p79 = scmp.ne.s32.totalorder %s67, %s68
      %p80 = scmp.eq.s32.totalorder %s23, 1
      %p81 = por %p79, %p80
      %p83 = scmp.ne.s32.totalorder %s68, %s82
      %p84 = scmp.eq.s32.totalorder %s23, 0
      %p85 = por %p83, %p84
      %s87 = sadd.s32 %s86, 1
      %p90 = scmp.eq.s32.totalorder %s17, 1
      %p91 = scmp.ne.s32.totalorder %s86, %s88
      %p92 = scmp.eq.s32.totalorder %s17, 0
      %p93 = por %p91, %p92
      %p94 = scmp.ne.s32.totalorder %s86, %s88
      %p95 = scmp.eq.s32.totalorder %s22, 1
      %p96 = por %p94, %p95
      %p97 = scmp.ne.s32.totalorder %s88, %s89
      %p98 = scmp.eq.s32.totalorder %s22, 0
      %p99 = por %p97, %p98
      %p100 = scmp.ne.s32.totalorder %s88, %s89
      %p101 = scmp.eq.s32.totalorder %s23, 1
      %p102 = por %p100, %p101
      %p104 = scmp.ne.s32.totalorder %s89, %s103
      %p105 = scmp.eq.s32.totalorder %s23, 0
      %p106 = por %p104, %p105
      %s107 = sadd.s32 %s24, %s25
      %s108 = sadd.s32 %s36, %s32
      %s109 = ssub.s32 %s107, %s108
      %p110 = scmp.eq.s32.totalorder %s109, 0
      %s112 = sadd.s32 %s111, 1
      %s113 = scalar_select %p110, %s111, %s112
      %p116 = pneg %p110
      %p117 = scmp.eq.s32.totalorder %s17, 1
      %p118 = por %p116, %p117
      %p119 = scmp.ne.s32.totalorder %s111, %s114
      %p120 = scmp.eq.s32.totalorder %s17, 0
      %p121 = por %p119, %p120
      %p122 = scmp.ne.s32.totalorder %s111, %s114
      %p123 = scmp.eq.s32.totalorder %s22, 1
      %p124 = por %p122, %p123
      %p125 = scmp.ne.s32.totalorder %s114, %s115
      %p126 = scmp.eq.s32.totalorder %s22, 0
      %p127 = por %p125, %p126
      %p128 = scmp.ne.s32.totalorder %s114, %s115
      %p129 = scmp.eq.s32.totalorder %s23, 1
      %p130 = por %p128, %p129
      %p132 = scmp.ne.s32.totalorder %s115, %s131
      %p133 = scmp.eq.s32.totalorder %s23, 0
      %p134 = por %p132, %p133
      %s135 = ssub.s32 %s24, %s36
      %p136 = scmp.eq.s32.totalorder %s135, 0
      %s138 = sadd.s32 %s137, 1
      %s139 = scalar_select %p136, %s137, %s138
      %p142 = pneg %p136
      %p143 = scmp.eq.s32.totalorder %s17, 1
      %p144 = por %p142, %p143
      %p145 = scmp.ne.s32.totalorder %s137, %s140
      %p146 = scmp.eq.s32.totalorder %s17, 0
      %p147 = por %p145, %p146
      %p148 = scmp.ne.s32.totalorder %s137, %s140
      %p149 = scmp.eq.s32.totalorder %s22, 1
      %p150 = por %p148, %p149
      %p151 = scmp.ne.s32.totalorder %s140, %s141
      %p152 = scmp.eq.s32.totalorder %s22, 0
      %p153 = por %p151, %p152
      %p154 = scmp.ne.s32.totalorder %s140, %s141
      %p155 = scmp.eq.s32.totalorder %s23, 1
      %p156 = por %p154, %p155
      %p158 = scmp.ne.s32.totalorder %s141, %s157
      %p159 = scmp.eq.s32.totalorder %s23, 0
      %p160 = por %p158, %p159
      %p161 = scmp.le.s32.totalorder 1, %s17
      %p162 = scmp.lt.s32.totalorder %s17, 3
      %p163 = pnand %p161, %p162
      %p164 = pneg %p163
      // Predicated region
      $region9: #{tpu_custom_call.1} parent=5 // pred_check
        _
      $region10: #{tpu_custom_call.1} parent=5 // pred_check_branch
        %166 = sbr.rel (%p163) target = $region12
      $region11: #{tpu_custom_call.1} parent=5 // pred_region
        %s167 = ssub.s32 %s17, 1
        // Predicated region
        $region13: #{tpu_custom_call.1} parent=11 // pred_check
          %p168 = pneg %p78
        $region14: #{tpu_custom_call.1} parent=11 // pred_check_branch
          %170 = sbr.rel (%p168) target = $region16
        $region15: #{tpu_custom_call.1} parent=11 // pred_region
          _
        $region16: #{tpu_custom_call.1} parent=11 // pred_fallthru
          _
        // Predicated region
        $region17: #{tpu_custom_call.1} parent=11 // pred_check
          %p171 = pneg %p99
        $region18: #{tpu_custom_call.1} parent=11 // pred_check_branch
          %173 = sbr.rel (%p171) target = $region20
        $region19: #{tpu_custom_call.1} parent=11 // pred_region
          _
        $region20: #{tpu_custom_call.1} parent=11 // pred_fallthru
          _
      $region12: #{tpu_custom_call.1} parent=5 // pred_fallthru
        _
      %p174 = scmp.lt.s32.totalorder %s17, 2
      // Predicated region
      $region21: #{tpu_custom_call.1} parent=5 // pred_check
        %p175 = pneg %p174
      $region22: #{tpu_custom_call.1} parent=5 // pred_check_branch
        %177 = sbr.rel (%p175) target = $region24
      $region23: #{tpu_custom_call.1} parent=5 // pred_region
        // Predicated region
        $region25: #{tpu_custom_call.1} parent=23 // pred_check
          %p178 = pneg %p51
        $region26: #{tpu_custom_call.1} parent=23 // pred_check_branch
          %180 = sbr.rel (%p178) target = $region28
        $region27: #{tpu_custom_call.1} parent=23 // pred_region
          %s181 = sadd.s32 %s24, %s25
          %s182 = smul.u32 32, %s181
          %p183 = scmp.lt.s32.totalorder %s182, 63
          %s184 = scalar_select %p183, %s182, 63
          %s185 = smul.addr %s184, 4
          %s186 = scalar_lea.vmem %s0, %s185
          %s187 = sadd.s32 %s24, %s25
          %s188 = smul.u32 32, %s187
        $region28: #{tpu_custom_call.1} parent=23 // pred_fallthru
          _
      $region24: #{tpu_custom_call.1} parent=5 // pred_fallthru
        _
      %p189 = scmp.le.s32.totalorder 1, %s17
      %p190 = scmp.lt.s32.totalorder %s17, 3
      %p191 = pnand %p189, %p190
      %p192 = pneg %p191
      // Predicated region
      $region29: #{tpu_custom_call.1} parent=5 // pred_check
        _
      $region30: #{tpu_custom_call.1} parent=5 // pred_check_branch
        %194 = sbr.rel (%p191) target = $region32
      $region31: #{tpu_custom_call.1} parent=5 // pred_region
        %s195 = ssub.s32 %s17, 1
        %s196 = sadd.s32 %s26, %s27
        %s197 = smul.u32 32, %s196
        %p198 = scmp.lt.s32.totalorder %s197, 63
        %s199 = scalar_select %p198, %s197, 63
        %s200 = smul.addr %s199, 4
        %s201 = scalar_lea.vmem %s0, %s200
        %p202 = pneg %p57
        %p203 = pneg %p54
        %p204 = pneg %p78
        %p205 = pneg %p75
        %p206 = pneg %p99
        %p207 = pneg %p96
        %p208 = pneg %p127
        %p209 = pneg %p124
        %s210 = sand.u32 %s114, 1
        %s211 = scalar_lea.sflag [#allocation3], %s210
        %s212 = sand.u32 %s114, 1
        %s213 = smul.addr %s212, 128
        %s214 = scalar_lea.vmem [#allocation2], %s213
        %p215 = pneg %p153
        %p216 = pneg %p150
        %s217 = sand.u32 %s140, 1
        %s218 = scalar_lea.sflag [#allocation5], %s217
        %s219 = sand.u32 %s140, 1
        %s220 = smul.addr %s219, 2
        %s221 = scalar_lea.vmem [#allocation4], %s220
        %s222 = sadd.s32 %s26, %s27
        %s223 = smul.u32 32, %s222
        %p224 = scmp.lt.s32.totalorder %s223, 63
        %s225 = scalar_select %p224, %s223, 63
        %s226 = smul.addr %s225, 4
        %s227 = scalar_lea.vmem %s0, %s226
        %s228 = sadd.s32 %s26, %s27
        %s229 = smul.u32 32, %s228
        %s230 = sadd.s32 %s26, %s27
        %s231 = smul.u32 32, %s230
        %v233 = vld [vmem:[%s227] sm:$0xf]
        %v234 = vld [vmem:[%s227 + $0x4] sm:$0xf]
        %v235 = vld [vmem:[%s227 + $0x8] sm:$0xf]
        %v236 = vld [vmem:[%s227 + $0xc] sm:$0xf]
        %v237 = vld [vmem:[%s227 + $0x10] sm:$0xf]
        %v238 = vld [vmem:[%s227 + $0x14] sm:$0xf]
        %v239 = vld [vmem:[%s227 + $0x18] sm:$0xf]
        %v240 = vld [vmem:[%s227 + $0x1c] sm:$0xf]
        %v241 = vld [vmem:[%s227 + $0x20] sm:$0xf]
        %v242 = vld [vmem:[%s227 + $0x24] sm:$0xf]
        %v243 = vld [vmem:[%s227 + $0x28] sm:$0xf]
        %v244 = vld [vmem:[%s227 + $0x2c] sm:$0xf]
        %v245 = vld [vmem:[%s227 + $0x30] sm:$0xf]
        %v246 = vld [vmem:[%s227 + $0x34] sm:$0xf]
        %v247 = vld [vmem:[%s227 + $0x38] sm:$0xf]
        %v248 = vld [vmem:[%s227 + $0x3c] sm:$0xf]
        %v249 = vld [vmem:[%s227 + $0x40] sm:$0xf]
        %v250 = vld [vmem:[%s227 + $0x44] sm:$0xf]
        %v251 = vld [vmem:[%s227 + $0x48] sm:$0xf]
        %v252 = vld [vmem:[%s227 + $0x4c] sm:$0xf]
        %v253 = vld [vmem:[%s227 + $0x50] sm:$0xf]
        %v254 = vld [vmem:[%s227 + $0x54] sm:$0xf]
        %v255 = vld [vmem:[%s227 + $0x58] sm:$0xf]
        %v256 = vld [vmem:[%s227 + $0x5c] sm:$0xf]
        %v257 = vld [vmem:[%s227 + $0x60] sm:$0xf]
        %v258 = vld [vmem:[%s227 + $0x64] sm:$0xf]
        %v259 = vld [vmem:[%s227 + $0x68] sm:$0xf]
        %v260 = vld [vmem:[%s227 + $0x6c] sm:$0xf]
        %v261 = vld [vmem:[%s227 + $0x70] sm:$0xf]
        %v262 = vld [vmem:[%s227 + $0x74] sm:$0xf]
        %v263 = vld [vmem:[%s227 + $0x78] sm:$0xf]
        %v264 = vld [vmem:[%s227 + $0x7c] sm:$0xf]
        %v265 = vld [vmem:[%s1] sm:$0xf]
        %v266 = vld [vmem:[%s1 + $0x4] sm:$0xf]
        %v267 = vld [vmem:[%s1 + $0x8] sm:$0xf]
        %v268 = vld [vmem:[%s1 + $0xc] sm:$0xf]
        %v269 = vld [vmem:[%s1 + $0x10] sm:$0x3]
        %v270 = vld [vmem:[%s2] sm:$0x1]
        %v272 = vlaneseq
        %v273 = vshrl.u32 %v272, 7
        %v274 = vsub.s32 0, %v273
        %v275 = vrot.slane %v270, %v274
        %v309 = vunpack.c.l.b16 %v233
        %v310 = vunpack.c.l.b16 %v234
        %v311 = vunpack.c.l.b16 %v235
        %v312 = vunpack.c.l.b16 %v236
        %v313 = vunpack.c.l.b16 %v237
        %v314 = vunpack.c.l.b16 %v238
        %v315 = vunpack.c.l.b16 %v239
        %v316 = vunpack.c.l.b16 %v240
        %v317 = vunpack.c.l.b16 %v241
        %v318 = vunpack.c.l.b16 %v242
        %v319 = vunpack.c.l.b16 %v243
        %v320 = vunpack.c.l.b16 %v244
        %v321 = vunpack.c.l.b16 %v245
        %v322 = vunpack.c.l.b16 %v246
        %v323 = vunpack.c.l.b16 %v247
        %v324 = vunpack.c.l.b16 %v248
        %v325 = vunpack.c.l.b16 %v249
        %v326 = vunpack.c.l.b16 %v250
        %v327 = vunpack.c.l.b16 %v251
        %v328 = vunpack.c.l.b16 %v252
        %v329 = vunpack.c.l.b16 %v253
        %v330 = vunpack.c.l.b16 %v254
        %v331 = vunpack.c.l.b16 %v255
        %v332 = vunpack.c.l.b16 %v256
        %v333 = vunpack.c.l.b16 %v257
        %v334 = vunpack.c.l.b16 %v258
        %v335 = vunpack.c.l.b16 %v259
        %v336 = vunpack.c.l.b16 %v260
        %v337 = vunpack.c.l.b16 %v261
        %v338 = vunpack.c.l.b16 %v262
        %v339 = vunpack.c.l.b16 %v263
        %v340 = vunpack.c.l.b16 %v264
        %v341 = vpack.c.b16 %v310, %v309
        %v342 = vpack.c.b16 %v312, %v311
        %v343 = vpack.c.b16 %v314, %v313
        %v344 = vpack.c.b16 %v316, %v315
        %v345 = vpack.c.b16 %v318, %v317
        %v346 = vpack.c.b16 %v320, %v319
        %v347 = vpack.c.b16 %v322, %v321
        %v348 = vpack.c.b16 %v324, %v323
        %v349 = vpack.c.b16 %v326, %v325
        %v350 = vpack.c.b16 %v328, %v327
        %v351 = vpack.c.b16 %v330, %v329
        %v352 = vpack.c.b16 %v332, %v331
        %v353 = vpack.c.b16 %v334, %v333
        %v354 = vpack.c.b16 %v336, %v335
        %v355 = vpack.c.b16 %v338, %v337
        %v356 = vpack.c.b16 %v340, %v339
        %v362 = vunpack.c.l.b16 %v265
        %v363 = vunpack.c.l.b16 %v266
        %v364 = vunpack.c.l.b16 %v267
        %v365 = vunpack.c.l.b16 %v268
        %v366 = vunpack.c.l.b16 %v269
        %v367 = vpack.c.b16 %v363, %v362
        %v368 = vpack.c.b16 %v365, %v364
        %v369 = vpack.c.b16 %v366, %v366
        %vm372 = vcmask 293888
        %v374 = vsel %vm372, %v341, 0
        %v377 = vsel %vm372, %v342, 0
        %v380 = vsel %vm372, %v343, 0
        %v383 = vsel %vm372, %v344, 0
        %v386 = vsel %vm372, %v345, 0
        %v389 = vsel %vm372, %v346, 0
        %v392 = vsel %vm372, %v347, 0
        %v395 = vsel %vm372, %v348, 0
        %v398 = vsel %vm372, %v349, 0
        %v401 = vsel %vm372, %v350, 0
        %v404 = vsel %vm372, %v351, 0
        %v407 = vsel %vm372, %v352, 0
        %v410 = vsel %vm372, %v353, 0
        %v413 = vsel %vm372, %v354, 0
        %v416 = vsel %vm372, %v355, 0
        %v419 = vsel %vm372, %v356, 0
        %vm421 = vcmask 1041408
        %v423 = vsel %vm421, %v369, 0
        %425 = vmatprep.subr.bf16.mxu0 0
        %426 = vmatpush1.bf16.msra.mxu0 0
        %427 = vmatprep.subr.bf16.mxu0 0
        %428 = vmatpush1.bf16.msra.mxu0 0
        %429 = vmatprep.subr.bf16.mxu0 0
        %430 = vmatpush1.bf16.msra.mxu0 0
        %431 = vmatprep.subr.bf16.mxu0 0
        %432 = vmatpush1.bf16.msra.mxu0 0
        %433 = vmatprep.subr.bf16.mxu0 0
        %434 = vmatpush1.bf16.msra.mxu0 0
        %435 = vmatprep.subr.bf16.mxu0 0
        %436 = vmatpush1.bf16.msra.mxu0 %v423
        %437 = vmatprep.subr.bf16.mxu0 0
        %438 = vmatpush1.bf16.msra.mxu0 %v368
        %439 = vmatprep.subr.bf16.mxu0 0
        %440 = vmatpush1.bf16.msra.mxu0 %v367
        %441 = vmatprep.subr.bf16.mxu0 0
        %442 = vmatpush2.bf16.msra.mxu0 0
        %443 = vmatprep.subr.bf16.mxu0 0
        %444 = vmatpush2.bf16.msra.mxu0 0
        %445 = vmatprep.subr.bf16.mxu0 0
        %446 = vmatpush2.bf16.msra.mxu0 0
        %447 = vmatprep.subr.bf16.mxu0 0
        %448 = vmatpush2.bf16.msra.mxu0 0
        %449 = vmatprep.subr.bf16.mxu0 0
        %450 = vmatpush2.bf16.msra.mxu0 0
        %451 = vmatprep.subr.bf16.mxu0 0
        %452 = vmatpush2.bf16.msra.mxu0 0
        %453 = vmatprep.subr.bf16.mxu0 0
        %454 = vmatpush2.bf16.msra.mxu0 0
        %455 = vmatprep.subr.bf16.mxu0 0
        %456 = vmatpush2.bf16.msra.mxu0 0
        %457 = vmatprep.mubr.bf16.mxu0 0
        %458 = vmatmul.mubr.bf16.gmra.mxu0 %v374
        %v459 = vpop.f32.mrf.mxu0
        %v460 = vadd.f32 %v275, %v459
        %v461 = vpop.f32.mrf.mxu0
        %v462 = vpop.f32.mrf.mxu0
        %v463 = vadd.f32 %v275, %v462
        %v464 = vpop.f32.mrf.mxu0
        %465 = vmatprep.mubr.bf16.mxu0 0
        %466 = vmatmul.mubr.bf16.gmra.mxu0 %v377
        %v467 = vpop.f32.mrf.mxu0
        %v468 = vadd.f32 %v275, %v467
        %v469 = vpop.f32.mrf.mxu0
        %v470 = vpop.f32.mrf.mxu0
        %v471 = vadd.f32 %v275, %v470
        %v472 = vpop.f32.mrf.mxu0
        %473 = vmatprep.mubr.bf16.mxu0 0
        %474 = vmatmul.mubr.bf16.gmra.mxu0 %v380
        %v475 = vpop.f32.mrf.mxu0
        %v476 = vadd.f32 %v275, %v475
        %v477 = vpop.f32.mrf.mxu0
        %v478 = vpop.f32.mrf.mxu0
        %v479 = vadd.f32 %v275, %v478
        %v480 = vpop.f32.mrf.mxu0
        %481 = vmatprep.mubr.bf16.mxu0 0
        %482 = vmatmul.mubr.bf16.gmra.mxu0 %v383
        %v483 = vpop.f32.mrf.mxu0
        %v484 = vadd.f32 %v275, %v483
        %v485 = vpop.f32.mrf.mxu0
        %v486 = vpop.f32.mrf.mxu0
        %v487 = vadd.f32 %v275, %v486
        %v488 = vpop.f32.mrf.mxu0
        %489 = vmatprep.mubr.bf16.mxu0 0
        %490 = vmatmul.mubr.bf16.gmra.mxu0 %v386
        %v491 = vpop.f32.mrf.mxu0
        %v492 = vadd.f32 %v275, %v491
        %v493 = vpop.f32.mrf.mxu0
        %v494 = vpop.f32.mrf.mxu0
        %v495 = vadd.f32 %v275, %v494
        %v496 = vpop.f32.mrf.mxu0
        %497 = vmatprep.mubr.bf16.mxu0 0
        %498 = vmatmul.mubr.bf16.gmra.mxu0 %v389
        %v499 = vpop.f32.mrf.mxu0
        %v500 = vadd.f32 %v275, %v499
        %v501 = vpop.f32.mrf.mxu0
        %v502 = vpop.f32.mrf.mxu0
        %v503 = vadd.f32 %v275, %v502
        %v504 = vpop.f32.mrf.mxu0
        %505 = vmatprep.mubr.bf16.mxu0 0
        %506 = vmatmul.mubr.bf16.gmra.mxu0 %v392
        %v507 = vpop.f32.mrf.mxu0
        %v508 = vadd.f32 %v275, %v507
        %v509 = vpop.f32.mrf.mxu0
        %v510 = vpop.f32.mrf.mxu0
        %v511 = vadd.f32 %v275, %v510
        %v512 = vpop.f32.mrf.mxu0
        %513 = vmatprep.mubr.bf16.mxu0 0
        %514 = vmatmul.mubr.bf16.gmra.mxu0 %v395
        %v515 = vpop.f32.mrf.mxu0
        %v516 = vadd.f32 %v275, %v515
        %v517 = vpop.f32.mrf.mxu0
        %v518 = vpop.f32.mrf.mxu0
        %v519 = vadd.f32 %v275, %v518
        %v520 = vpop.f32.mrf.mxu0
        %521 = vmatprep.mubr.bf16.mxu0 0
        %522 = vmatmul.mubr.bf16.gmra.mxu0 %v398
        %v523 = vpop.f32.mrf.mxu0
        %v524 = vadd.f32 %v275, %v523
        %v525 = vpop.f32.mrf.mxu0
        %v526 = vpop.f32.mrf.mxu0
        %v527 = vadd.f32 %v275, %v526
        %v528 = vpop.f32.mrf.mxu0
        %529 = vmatprep.mubr.bf16.mxu0 0
        %530 = vmatmul.mubr.bf16.gmra.mxu0 %v401
        %v531 = vpop.f32.mrf.mxu0
        %v532 = vadd.f32 %v275, %v531
        %v533 = vpop.f32.mrf.mxu0
        %v534 = vpop.f32.mrf.mxu0
        %v535 = vadd.f32 %v275, %v534
        %v536 = vpop.f32.mrf.mxu0
        %537 = vmatprep.mubr.bf16.mxu0 0
        %538 = vmatmul.mubr.bf16.gmra.mxu0 %v404
        %v539 = vpop.f32.mrf.mxu0
        %v540 = vadd.f32 %v275, %v539
        %v541 = vpop.f32.mrf.mxu0
        %v542 = vpop.f32.mrf.mxu0
        %v543 = vadd.f32 %v275, %v542
        %v544 = vpop.f32.mrf.mxu0
        %545 = vmatprep.mubr.bf16.mxu0 0
        %546 = vmatmul.mubr.bf16.gmra.mxu0 %v407
        %v547 = vpop.f32.mrf.mxu0
        %v548 = vadd.f32 %v275, %v547
        %v549 = vpop.f32.mrf.mxu0
        %v550 = vpop.f32.mrf.mxu0
        %v551 = vadd.f32 %v275, %v550
        %v552 = vpop.f32.mrf.mxu0
        %553 = vmatprep.mubr.bf16.mxu0 0
        %554 = vmatmul.mubr.bf16.gmra.mxu0 %v410
        %v555 = vpop.f32.mrf.mxu0
        %v556 = vadd.f32 %v275, %v555
        %v557 = vpop.f32.mrf.mxu0
        %v558 = vpop.f32.mrf.mxu0
        %v559 = vadd.f32 %v275, %v558
        %v560 = vpop.f32.mrf.mxu0
        %561 = vmatprep.mubr.bf16.mxu0 0
        %562 = vmatmul.mubr.bf16.gmra.mxu0 %v413
        %v563 = vpop.f32.mrf.mxu0
        %v564 = vadd.f32 %v275, %v563
        %v565 = vpop.f32.mrf.mxu0
        %v566 = vpop.f32.mrf.mxu0
        %v567 = vadd.f32 %v275, %v566
        %v568 = vpop.f32.mrf.mxu0
        %569 = vmatprep.mubr.bf16.mxu0 0
        %570 = vmatmul.mubr.bf16.gmra.mxu0 %v416
        %v571 = vpop.f32.mrf.mxu0
        %v572 = vadd.f32 %v275, %v571
        %v573 = vpop.f32.mrf.mxu0
        %v574 = vpop.f32.mrf.mxu0
        %v575 = vadd.f32 %v275, %v574
        %v576 = vpop.f32.mrf.mxu0
        %577 = vmatprep.mubr.bf16.mxu0 0
        %578 = vmatmul.mubr.bf16.gmra.mxu0 %v419
        %v579 = vpop.f32.mrf.mxu0
        %v580 = vadd.f32 %v275, %v579
        %v581 = vpop.f32.mrf.mxu0
        %v582 = vpop.f32.mrf.mxu0
        %v583 = vadd.f32 %v275, %v582
        %v584 = vpop.f32.mrf.mxu0
        %585 = vdwg.mxu0
        %v586 = vlaneseq
        %v587 = vshrl.u32 %v586, 7
        %v588 = vadd.s32 %v587, 8
        %v589 = vadd.s32 %v587, 16
        %v590 = vadd.s32 %v587, 24
        %v591 = vadd.s32 %v587, 32
        %v592 = vadd.s32 %v587, 40
        %v593 = vadd.s32 %v587, 48
        %v594 = vadd.s32 %v587, 56
        %v595 = vadd.s32 %v587, 64
        %v596 = vadd.s32 %v587, 72
        %v597 = vadd.s32 %v587, 80
        %v598 = vadd.s32 %v587, 88
        %v599 = vadd.s32 %v587, 96
        %v600 = vadd.s32 %v587, 104
        %v601 = vadd.s32 %v587, 112
        %v602 = vadd.s32 %v587, 120
        %v603 = vadd.s32 %v587, 128
        %v604 = vadd.s32 %v587, 136
        %v605 = vadd.s32 %v587, 144
        %v606 = vadd.s32 %v587, 152
        %v607 = vadd.s32 %v587, 160
        %v608 = vadd.s32 %v587, 168
        %v609 = vadd.s32 %v587, 176
        %v610 = vadd.s32 %v587, 184
        %v611 = vadd.s32 %v587, 192
        %v612 = vadd.s32 %v587, 200
        %v613 = vadd.s32 %v587, 208
        %v614 = vadd.s32 %v587, 216
        %v615 = vadd.s32 %v587, 224
        %v616 = vadd.s32 %v587, 232
        %v617 = vadd.s32 %v587, 240
        %v618 = vadd.s32 %v587, 248
        %s619 = smul.u32 %s27, 256
        %v620 = vstv %s619
        %v621 = vadd.s32 %v587, %v620
        %v622 = vadd.s32 %v588, %v620
        %v623 = vadd.s32 %v589, %v620
        %v624 = vadd.s32 %v590, %v620
        %v625 = vadd.s32 %v591, %v620
        %v626 = vadd.s32 %v592, %v620
        %v627 = vadd.s32 %v593, %v620
        %v628 = vadd.s32 %v594, %v620
        %v629 = vadd.s32 %v595, %v620
        %v630 = vadd.s32 %v596, %v620
        %v631 = vadd.s32 %v597, %v620
        %v632 = vadd.s32 %v598, %v620
        %v633 = vadd.s32 %v599, %v620
        %v634 = vadd.s32 %v600, %v620
        %v635 = vadd.s32 %v601, %v620
        %v636 = vadd.s32 %v602, %v620
        %v637 = vadd.s32 %v603, %v620
        %v638 = vadd.s32 %v604, %v620
        %v639 = vadd.s32 %v605, %v620
        %v640 = vadd.s32 %v606, %v620
        %v641 = vadd.s32 %v607, %v620
        %v642 = vadd.s32 %v608, %v620
        %v643 = vadd.s32 %v609, %v620
        %v644 = vadd.s32 %v610, %v620
        %v645 = vadd.s32 %v611, %v620
        %v646 = vadd.s32 %v612, %v620
        %v647 = vadd.s32 %v613, %v620
        %v648 = vadd.s32 %v614, %v620
        %v649 = vadd.s32 %v615, %v620
        %v650 = vadd.s32 %v616, %v620
        %v651 = vadd.s32 %v617, %v620
        %v652 = vadd.s32 %v618, %v620
        %vm653 = vcmp.lt.s32.totalorder %v621, 256
        %vm654 = vcmp.lt.s32.totalorder %v622, 256
        %vm655 = vcmp.lt.s32.totalorder %v623, 256
        %vm656 = vcmp.lt.s32.totalorder %v624, 256
        %vm657 = vcmp.lt.s32.totalorder %v625, 256
        %vm658 = vcmp.lt.s32.totalorder %v626, 256
        %vm659 = vcmp.lt.s32.totalorder %v627, 256
        %vm660 = vcmp.lt.s32.totalorder %v628, 256
        %vm661 = vcmp.lt.s32.totalorder %v629, 256
        %vm662 = vcmp.lt.s32.totalorder %v630, 256
        %vm663 = vcmp.lt.s32.totalorder %v631, 256
        %vm664 = vcmp.lt.s32.totalorder %v632, 256
        %vm665 = vcmp.lt.s32.totalorder %v633, 256
        %vm666 = vcmp.lt.s32.totalorder %v634, 256
        %vm667 = vcmp.lt.s32.totalorder %v635, 256
        %vm668 = vcmp.lt.s32.totalorder %v636, 256
        %vm669 = vcmp.lt.s32.totalorder %v637, 256
        %vm670 = vcmp.lt.s32.totalorder %v638, 256
        %vm671 = vcmp.lt.s32.totalorder %v639, 256
        %vm672 = vcmp.lt.s32.totalorder %v640, 256
        %vm673 = vcmp.lt.s32.totalorder %v641, 256
        %vm674 = vcmp.lt.s32.totalorder %v642, 256
        %vm675 = vcmp.lt.s32.totalorder %v643, 256
        %vm676 = vcmp.lt.s32.totalorder %v644, 256
        %vm677 = vcmp.lt.s32.totalorder %v645, 256
        %vm678 = vcmp.lt.s32.totalorder %v646, 256
        %vm679 = vcmp.lt.s32.totalorder %v647, 256
        %vm680 = vcmp.lt.s32.totalorder %v648, 256
        %vm681 = vcmp.lt.s32.totalorder %v649, 256
        %vm682 = vcmp.lt.s32.totalorder %v650, 256
        %vm683 = vcmp.lt.s32.totalorder %v651, 256
        %vm684 = vcmp.lt.s32.totalorder %v652, 256
        %v685 = vsel %vm653, 1, 0
        %v686 = vsel %vm654, 1, 0
        %v687 = vsel %vm655, 1, 0
        %v688 = vsel %vm656, 1, 0
        %v689 = vsel %vm657, 1, 0
        %v690 = vsel %vm658, 1, 0
        %v691 = vsel %vm659, 1, 0
        %v692 = vsel %vm660, 1, 0
        %v693 = vsel %vm661, 1, 0
        %v694 = vsel %vm662, 1, 0
        %v695 = vsel %vm663, 1, 0
        %v696 = vsel %vm664, 1, 0
        %v697 = vsel %vm665, 1, 0
        %v698 = vsel %vm666, 1, 0
        %v699 = vsel %vm667, 1, 0
        %v700 = vsel %vm668, 1, 0
        %v701 = vsel %vm669, 1, 0
        %v702 = vsel %vm670, 1, 0
        %v703 = vsel %vm671, 1, 0
        %v704 = vsel %vm672, 1, 0
        %v705 = vsel %vm673, 1, 0
        %v706 = vsel %vm674, 1, 0
        %v707 = vsel %vm675, 1, 0
        %v708 = vsel %vm676, 1, 0
        %v709 = vsel %vm677, 1, 0
        %v710 = vsel %vm678, 1, 0
        %v711 = vsel %vm679, 1, 0
        %v712 = vsel %vm680, 1, 0
        %v713 = vsel %vm681, 1, 0
        %v714 = vsel %vm682, 1, 0
        %v715 = vsel %vm683, 1, 0
        %v716 = vsel %vm684, 1, 0
        %v717 = vcvt.s32.f32 %v685
        %v718 = vcvt.s32.f32 %v686
        %v719 = vcvt.s32.f32 %v687
        %v720 = vcvt.s32.f32 %v688
        %v721 = vcvt.s32.f32 %v689
        %v722 = vcvt.s32.f32 %v690
        %v723 = vcvt.s32.f32 %v691
        %v724 = vcvt.s32.f32 %v692
        %v725 = vcvt.s32.f32 %v693
        %v726 = vcvt.s32.f32 %v694
        %v727 = vcvt.s32.f32 %v695
        %v728 = vcvt.s32.f32 %v696
        %v729 = vcvt.s32.f32 %v697
        %v730 = vcvt.s32.f32 %v698
        %v731 = vcvt.s32.f32 %v699
        %v732 = vcvt.s32.f32 %v700
        %v733 = vcvt.s32.f32 %v701
        %v734 = vcvt.s32.f32 %v702
        %v735 = vcvt.s32.f32 %v703
        %v736 = vcvt.s32.f32 %v704
        %v737 = vcvt.s32.f32 %v705
        %v738 = vcvt.s32.f32 %v706
        %v739 = vcvt.s32.f32 %v707
        %v740 = vcvt.s32.f32 %v708
        %v741 = vcvt.s32.f32 %v709
        %v742 = vcvt.s32.f32 %v710
        %v743 = vcvt.s32.f32 %v711
        %v744 = vcvt.s32.f32 %v712
        %v745 = vcvt.s32.f32 %v713
        %v746 = vcvt.s32.f32 %v714
        %v747 = vcvt.s32.f32 %v715
        %v748 = vcvt.s32.f32 %v716
        %v749 = vmul.f32 %v460, %v717
        %v750 = vmul.f32 %v463, %v718
        %v751 = vmul.f32 %v468, %v719
        %v752 = vmul.f32 %v471, %v720
        %v753 = vmul.f32 %v476, %v721
        %v754 = vmul.f32 %v479, %v722
        %v755 = vmul.f32 %v484, %v723
        %v756 = vmul.f32 %v487, %v724
        %v757 = vmul.f32 %v492, %v725
        %v758 = vmul.f32 %v495, %v726
        %v759 = vmul.f32 %v500, %v727
        %v760 = vmul.f32 %v503, %v728
        %v761 = vmul.f32 %v508, %v729
        %v762 = vmul.f32 %v511, %v730
        %v763 = vmul.f32 %v516, %v731
        %v764 = vmul.f32 %v519, %v732
        %v765 = vmul.f32 %v524, %v733
        %v766 = vmul.f32 %v527, %v734
        %v767 = vmul.f32 %v532, %v735
        %v768 = vmul.f32 %v535, %v736
        %v769 = vmul.f32 %v540, %v737
        %v770 = vmul.f32 %v543, %v738
        %v771 = vmul.f32 %v548, %v739
        %v772 = vmul.f32 %v551, %v740
        %v773 = vmul.f32 %v556, %v741
        %v774 = vmul.f32 %v559, %v742
        %v775 = vmul.f32 %v564, %v743
        %v776 = vmul.f32 %v567, %v744
        %v777 = vmul.f32 %v572, %v745
        %v778 = vmul.f32 %v575, %v746
        %v779 = vmul.f32 %v580, %v747
        %v780 = vmul.f32 %v583, %v748
        %v781 = vadd.f32 %v749, %v750
        %v782 = vadd.f32 %v781, %v751
        %v783 = vadd.f32 %v782, %v752
        %v784 = vadd.f32 %v783, %v753
        %v785 = vadd.f32 %v784, %v754
        %v786 = vadd.f32 %v785, %v755
        %v787 = vadd.f32 %v786, %v756
        %v788 = vadd.f32 %v787, %v757
        %v789 = vadd.f32 %v788, %v758
        %v790 = vadd.f32 %v789, %v759
        %v791 = vadd.f32 %v790, %v760
        %v792 = vadd.f32 %v791, %v761
        %v793 = vadd.f32 %v792, %v762
        %v794 = vadd.f32 %v793, %v763
        %v795 = vadd.f32 %v794, %v764
        %v796 = vadd.f32 %v795, %v765
        %v797 = vadd.f32 %v796, %v766
        %v798 = vadd.f32 %v797, %v767
        %v799 = vadd.f32 %v798, %v768
        %v800 = vadd.f32 %v799, %v769
        %v801 = vadd.f32 %v800, %v770
        %v802 = vadd.f32 %v801, %v771
        %v803 = vadd.f32 %v802, %v772
        %v804 = vadd.f32 %v803, %v773
        %v805 = vadd.f32 %v804, %v774
        %v806 = vadd.f32 %v805, %v775
        %v807 = vadd.f32 %v806, %v776
        %v808 = vadd.f32 %v807, %v777
        %v809 = vadd.f32 %v808, %v778
        %v810 = vadd.f32 %v809, %v779
        %v811 = vadd.f32 %v810, %v780
        %v812 = vrot.slane %v811, 4
        %v813 = vadd.f32 %v811, %v812
        %v814 = vrot.slane %v813, 2
        %v815 = vadd.f32 %v813, %v814
        %v816 = vrot.slane %v815, 1
        %v817 = vadd.f32 %v815, %v816
        %v818 = vmul.f32 %v749, %v460
        %v819 = vmul.f32 %v750, %v463
        %v820 = vmul.f32 %v751, %v468
        %v821 = vmul.f32 %v752, %v471
        %v822 = vmul.f32 %v753, %v476
        %v823 = vmul.f32 %v754, %v479
        %v824 = vmul.f32 %v755, %v484
        %v825 = vmul.f32 %v756, %v487
        %v826 = vmul.f32 %v757, %v492
        %v827 = vmul.f32 %v758, %v495
        %v828 = vmul.f32 %v759, %v500
        %v829 = vmul.f32 %v760, %v503
        %v830 = vmul.f32 %v761, %v508
        %v831 = vmul.f32 %v762, %v511
        %v832 = vmul.f32 %v763, %v516
        %v833 = vmul.f32 %v764, %v519
        %v834 = vmul.f32 %v765, %v524
        %v835 = vmul.f32 %v766, %v527
        %v836 = vmul.f32 %v767, %v532
        %v837 = vmul.f32 %v768, %v535
        %v838 = vmul.f32 %v769, %v540
        %v839 = vmul.f32 %v770, %v543
        %v840 = vmul.f32 %v771, %v548
        %v841 = vmul.f32 %v772, %v551
        %v842 = vmul.f32 %v773, %v556
        %v843 = vmul.f32 %v774, %v559
        %v844 = vmul.f32 %v775, %v564
        %v845 = vmul.f32 %v776, %v567
        %v846 = vmul.f32 %v777, %v572
        %v847 = vmul.f32 %v778, %v575
        %v848 = vmul.f32 %v779, %v580
        %v849 = vmul.f32 %v780, %v583
        %v850 = vadd.f32 %v818, %v819
        %v851 = vadd.f32 %v850, %v820
        %v852 = vadd.f32 %v851, %v821
        %v853 = vadd.f32 %v852, %v822
        %v854 = vadd.f32 %v853, %v823
        %v855 = vadd.f32 %v854, %v824
        %v856 = vadd.f32 %v855, %v825
        %v857 = vadd.f32 %v856, %v826
        %v858 = vadd.f32 %v857, %v827
        %v859 = vadd.f32 %v858, %v828
        %v860 = vadd.f32 %v859, %v829
        %v861 = vadd.f32 %v860, %v830
        %v862 = vadd.f32 %v861, %v831
        %v863 = vadd.f32 %v862, %v832
        %v864 = vadd.f32 %v863, %v833
        %v865 = vadd.f32 %v864, %v834
        %v866 = vadd.f32 %v865, %v835
        %v867 = vadd.f32 %v866, %v836
        %v868 = vadd.f32 %v867, %v837
        %v869 = vadd.f32 %v868, %v838
        %v870 = vadd.f32 %v869, %v839
        %v871 = vadd.f32 %v870, %v840
        %v872 = vadd.f32 %v871, %v841
        %v873 = vadd.f32 %v872, %v842
        %v874 = vadd.f32 %v873, %v843
        %v875 = vadd.f32 %v874, %v844
        %v876 = vadd.f32 %v875, %v845
        %v877 = vadd.f32 %v876, %v846
        %v878 = vadd.f32 %v877, %v847
        %v879 = vadd.f32 %v878, %v848
        %v880 = vadd.f32 %v879, %v849
        %v881 = vrot.slane %v880, 4
        %v882 = vadd.f32 %v880, %v881
        %v883 = vrot.slane %v882, 2
        %v884 = vadd.f32 %v882, %v883
        %v885 = vrot.slane %v884, 1
        %v886 = vadd.f32 %v884, %v885
        %p887 = scmp.eq.s32.totalorder %s27, 0
        // Predicated region
        $region33: #{tpu_custom_call.1} parent=31 // pred_check
          %p888 = pneg %p887
        $region34: #{tpu_custom_call.1} parent=31 // pred_check_branch
          %890 = sbr.rel (%p888) target = $region36
        $region35: #{tpu_custom_call.1} parent=31 // pred_region
          %891 = vst [vmem:[%s221] sm:$0x3] 0.0
        $region36: #{tpu_custom_call.1} parent=31 // pred_fallthru
          _
        %v892 = vld [vmem:[%s221] sm:$0x3]
        %vm893 = vcmask 1040384
        %v894 = vsel %vm893, %v817, %v886
        %v895 = vadd.f32 %v892, %v894
        %896 = vst [vmem:[%s221] sm:$0x3] %v895
        %v897 = vpack.c.bf16 %v463, %v460
        %v898 = vpack.c.bf16 %v471, %v468
        %v899 = vpack.c.bf16 %v479, %v476
        %v900 = vpack.c.bf16 %v487, %v484
        %v901 = vpack.c.bf16 %v495, %v492
        %v902 = vpack.c.bf16 %v503, %v500
        %v903 = vpack.c.bf16 %v511, %v508
        %v904 = vpack.c.bf16 %v519, %v516
        %v905 = vpack.c.bf16 %v527, %v524
        %v906 = vpack.c.bf16 %v535, %v532
        %v907 = vpack.c.bf16 %v543, %v540
        %v908 = vpack.c.bf16 %v551, %v548
        %v909 = vpack.c.bf16 %v559, %v556
        %v910 = vpack.c.bf16 %v567, %v564
        %v911 = vpack.c.bf16 %v575, %v572
        %v912 = vpack.c.bf16 %v583, %v580
        %v929 = vunpack.c.l.b16 %v897
        %v930 = vunpack.c.h.b16 %v897
        %v931 = vunpack.c.l.b16 %v898
        %v932 = vunpack.c.h.b16 %v898
        %v933 = vunpack.c.l.b16 %v899
        %v934 = vunpack.c.h.b16 %v899
        %v935 = vunpack.c.l.b16 %v900
        %v936 = vunpack.c.h.b16 %v900
        %v937 = vunpack.c.l.b16 %v901
        %v938 = vunpack.c.h.b16 %v901
        %v939 = vunpack.c.l.b16 %v902
        %v940 = vunpack.c.h.b16 %v902
        %v941 = vunpack.c.l.b16 %v903
        %v942 = vunpack.c.h.b16 %v903
        %v943 = vunpack.c.l.b16 %v904
        %v944 = vunpack.c.h.b16 %v904
        %v945 = vunpack.c.l.b16 %v905
        %v946 = vunpack.c.h.b16 %v905
        %v947 = vunpack.c.l.b16 %v906
        %v948 = vunpack.c.h.b16 %v906
        %v949 = vunpack.c.l.b16 %v907
        %v950 = vunpack.c.h.b16 %v907
        %v951 = vunpack.c.l.b16 %v908
        %v952 = vunpack.c.h.b16 %v908
        %v953 = vunpack.c.l.b16 %v909
        %v954 = vunpack.c.h.b16 %v909
        %v955 = vunpack.c.l.b16 %v910
        %v956 = vunpack.c.h.b16 %v910
        %v957 = vunpack.c.l.b16 %v911
        %v958 = vunpack.c.h.b16 %v911
        %v959 = vunpack.c.l.b16 %v912
        %v960 = vunpack.c.h.b16 %v912
        %v961 = vpack.c.b16 %v929, %v929
        %v962 = vpack.c.b16 %v930, %v930
        %v963 = vpack.c.b16 %v931, %v931
        %v964 = vpack.c.b16 %v932, %v932
        %v965 = vpack.c.b16 %v933, %v933
        %v966 = vpack.c.b16 %v934, %v934
        %v967 = vpack.c.b16 %v935, %v935
        %v968 = vpack.c.b16 %v936, %v936
        %v969 = vpack.c.b16 %v937, %v937
        %v970 = vpack.c.b16 %v938, %v938
        %v971 = vpack.c.b16 %v939, %v939
        %v972 = vpack.c.b16 %v940, %v940
        %v973 = vpack.c.b16 %v941, %v941
        %v974 = vpack.c.b16 %v942, %v942
        %v975 = vpack.c.b16 %v943, %v943
        %v976 = vpack.c.b16 %v944, %v944
        %v977 = vpack.c.b16 %v945, %v945
        %v978 = vpack.c.b16 %v946, %v946
        %v979 = vpack.c.b16 %v947, %v947
        %v980 = vpack.c.b16 %v948, %v948
        %v981 = vpack.c.b16 %v949, %v949
        %v982 = vpack.c.b16 %v950, %v950
        %v983 = vpack.c.b16 %v951, %v951
        %v984 = vpack.c.b16 %v952, %v952
        %v985 = vpack.c.b16 %v953, %v953
        %v986 = vpack.c.b16 %v954, %v954
        %v987 = vpack.c.b16 %v955, %v955
        %v988 = vpack.c.b16 %v956, %v956
        %v989 = vpack.c.b16 %v957, %v957
        %v990 = vpack.c.b16 %v958, %v958
        %v991 = vpack.c.b16 %v959, %v959
        %v992 = vpack.c.b16 %v960, %v960
        %1025 = vst [vmem:[%s214] sm:$0xf] %v961
        %1026 = vst [vmem:[%s214 + $0x4] sm:$0xf] %v962
        %1027 = vst [vmem:[%s214 + $0x8] sm:$0xf] %v963
        %1028 = vst [vmem:[%s214 + $0xc] sm:$0xf] %v964
        %1029 = vst [vmem:[%s214 + $0x10] sm:$0xf] %v965
        %1030 = vst [vmem:[%s214 + $0x14] sm:$0xf] %v966
        %1031 = vst [vmem:[%s214 + $0x18] sm:$0xf] %v967
        %1032 = vst [vmem:[%s214 + $0x1c] sm:$0xf] %v968
        %1033 = vst [vmem:[%s214 + $0x20] sm:$0xf] %v969
        %1034 = vst [vmem:[%s214 + $0x24] sm:$0xf] %v970
        %1035 = vst [vmem:[%s214 + $0x28] sm:$0xf] %v971
        %1036 = vst [vmem:[%s214 + $0x2c] sm:$0xf] %v972
        %1037 = vst [vmem:[%s214 + $0x30] sm:$0xf] %v973
        %1038 = vst [vmem:[%s214 + $0x34] sm:$0xf] %v974
        %1039 = vst [vmem:[%s214 + $0x38] sm:$0xf] %v975
        %1040 = vst [vmem:[%s214 + $0x3c] sm:$0xf] %v976
        %1041 = vst [vmem:[%s214 + $0x40] sm:$0xf] %v977
        %1042 = vst [vmem:[%s214 + $0x44] sm:$0xf] %v978
        %1043 = vst [vmem:[%s214 + $0x48] sm:$0xf] %v979
        %1044 = vst [vmem:[%s214 + $0x4c] sm:$0xf] %v980
        %1045 = vst [vmem:[%s214 + $0x50] sm:$0xf] %v981
        %1046 = vst [vmem:[%s214 + $0x54] sm:$0xf] %v982
        %1047 = vst [vmem:[%s214 + $0x58] sm:$0xf] %v983
        %1048 = vst [vmem:[%s214 + $0x5c] sm:$0xf] %v984
        %1049 = vst [vmem:[%s214 + $0x60] sm:$0xf] %v985
        %1050 = vst [vmem:[%s214 + $0x64] sm:$0xf] %v986
        %1051 = vst [vmem:[%s214 + $0x68] sm:$0xf] %v987
        %1052 = vst [vmem:[%s214 + $0x6c] sm:$0xf] %v988
        %1053 = vst [vmem:[%s214 + $0x70] sm:$0xf] %v989
        %1054 = vst [vmem:[%s214 + $0x74] sm:$0xf] %v990
        %1055 = vst [vmem:[%s214 + $0x78] sm:$0xf] %v991
        %1056 = vst [vmem:[%s214 + $0x7c] sm:$0xf] %v992
        %s1057 = sand.u32 %s114, 1
        %s1058 = scalar_lea.sflag [#allocation3], %s1057
        %s1059 = sand.u32 %s114, 1
        %s1060 = smul.addr %s1059, 128
        %s1061 = scalar_lea.vmem [#allocation2], %s1060
        %s1062 = sand.u32 %s140, 1
        %s1063 = scalar_lea.sflag [#allocation5], %s1062
        %s1064 = sand.u32 %s140, 1
        %s1065 = smul.addr %s1064, 2
        %s1066 = scalar_lea.vmem [#allocation4], %s1065
        // Predicated region
        $region37: #{tpu_custom_call.1} parent=31 // pred_check
          %p1067 = pneg %p124
        $region38: #{tpu_custom_call.1} parent=31 // pred_check_branch
          %1069 = sbr.rel (%p1067) target = $region40
        $region39: #{tpu_custom_call.1} parent=31 // pred_region
          %s1070 = sadd.s32 %s26, %s27
          %s1071 = smul.u32 32, %s1070
          %s1073 = ssub.s32 2048, 2048
          %1074 = vsyncadd %s1058, %s1073
          %s1075 = smul.addr %s1071, 64
          %s1076 = scalar_lea.hbm %s3, %s1075
          %s1077 = sshll.u32 %s1061, 4
          %s1078 = int_to_ptr.vmem [resolvable:$true] %s1077
          %1083 = dma.vmem_to_hbm [thread:$0]  %s1078, 2048, %s1076, %s1058, 64, 64, 4
        $region40: #{tpu_custom_call.1} parent=31 // pred_fallthru
          _
        // Predicated region
        $region41: #{tpu_custom_call.1} parent=31 // pred_check
          %p1084 = pneg %p150
        $region42: #{tpu_custom_call.1} parent=31 // pred_check_branch
          %1086 = sbr.rel (%p1084) target = $region44
        $region43: #{tpu_custom_call.1} parent=31 // pred_region
          %s1088 = ssub.s32 32, 32
          %1089 = vsyncadd %s1063, %s1088
          %s1090 = smul.addr %s26, 32
          %s1091 = scalar_lea.hbm %s4, %s1090
          %s1093 = sshll.u32 %s1066, 4
          %s1094 = int_to_ptr.vmem [resolvable:$true] %s1093
          %1096 = dma.vmem_to_hbm [thread:$0]  %s1094, 32, %s1091, %s1063
        $region44: #{tpu_custom_call.1} parent=31 // pred_fallthru
          _
      $region32: #{tpu_custom_call.1} parent=5 // pred_fallthru
        _
      %p1097 = scmp.le.s32.totalorder 2, %s17
      // Predicated region
      $region45: #{tpu_custom_call.1} parent=5 // pred_check
        %p1098 = pneg %p1097
      $region46: #{tpu_custom_call.1} parent=5 // pred_check_branch
        %1100 = sbr.rel (%p1098) target = $region48
      $region47: #{tpu_custom_call.1} parent=5 // pred_region
        %s1101 = ssub.s32 %s17, 2
        // Predicated region
        $region49: #{tpu_custom_call.1} parent=47 // pred_check
          %p1102 = pneg %p130
        $region50: #{tpu_custom_call.1} parent=47 // pred_check_branch
          %1104 = sbr.rel (%p1102) target = $region52
        $region51: #{tpu_custom_call.1} parent=47 // pred_region
          %s1105 = sand.u32 %s115, 1
          %s1106 = scalar_lea.sflag [#allocation3], %s1105
          %s1107 = sand.u32 %s115, 1
          %s1108 = smul.addr %s1107, 128
          %s1109 = scalar_lea.vmem [#allocation2], %s1108
          %1110 = dma.done %s1106, 2048
        $region52: #{tpu_custom_call.1} parent=47 // pred_fallthru
          _
        // Predicated region
        $region53: #{tpu_custom_call.1} parent=47 // pred_check
          %p1111 = pneg %p156
        $region54: #{tpu_custom_call.1} parent=47 // pred_check_branch
          %1113 = sbr.rel (%p1111) target = $region56
        $region55: #{tpu_custom_call.1} parent=47 // pred_region
          %s1114 = sand.u32 %s141, 1
          %s1115 = scalar_lea.sflag [#allocation5], %s1114
          %s1116 = sand.u32 %s141, 1
          %s1117 = smul.addr %s1116, 2
          %s1118 = scalar_lea.vmem [#allocation4], %s1117
          %1119 = dma.done %s1115, 32
        $region56: #{tpu_custom_call.1} parent=47 // pred_fallthru
          _
      $region48: #{tpu_custom_call.1} parent=5 // pred_fallthru
        _
    $region6: #{tpu_custom_call.1} parent=1 // loop_footer
      %s21 = sadd.s32 1, %s17
    $region7: #{tpu_custom_call.1} parent=1 // loop_footer_branch
      %16 = sbr.rel target = $region3
    $region8: #{tpu_custom_call.1} parent=1 // loop_exit
      _
    %1120 = vsyncpa [#allocation3], 1
    %s1121 = scalar_lea.sflag [#allocation3], 1
    %1122 = vsyncpa %s1121, 1
    %1123 = vsyncpa [#allocation5], 1
    %s1124 = scalar_lea.sflag [#allocation5], 1
    %1125 = vsyncpa %s1124, 1

</llo_original>
